<compile_context>
chip_gen: v5e
topology: v5e:2x2
jax: 0.10.0
libtpu: 0.0.40
codegen_flags: <defaults>
</compile_context>

<pallas_src>
import math

import numpy as np
import jax
import jax.numpy as jnp
from jax import lax
from jax.experimental import pallas as pl
from jax.experimental.pallas import tpu as pltpu


def _bilinear_matrix(in_size, out_size):
    """Dense 1-D interpolation matrix reproducing PyTorch bilinear, align_corners=False."""
    scale = in_size / out_size
    d = np.arange(out_size, dtype=np.float64)
    src = (d + 0.5) * scale - 0.5
    src = np.maximum(src, 0.0)                       # PyTorch clamps negative source coords
    idx0 = np.minimum(np.floor(src).astype(np.int64), in_size - 1)
    idx1 = np.minimum(idx0 + 1, in_size - 1)
    lam = np.clip(src - idx0, 0.0, 1.0)
    A = np.zeros((out_size, in_size), dtype=np.float32)
    rows = np.arange(out_size)
    np.add.at(A, (rows, idx0), (1.0 - lam).astype(np.float32))
    np.add.at(A, (rows, idx1), lam.astype(np.float32))
    return A


def _pick_batch_block(batch):
    """Largest divisor of `batch` (<=8) that still leaves >=2 grid steps, so both
    v7x TensorCores get work while per-step overhead is amortized; else 1."""
    if batch == 1:
        return 1
    for d in range(min(batch, 8), 0, -1):
        if batch % d == 0 and batch // d >= 2:
            return d
    return 1


# ------------------------------ Pallas kernel -------------------------------

def _make_kernel(num_scales, g_first, bblk):
    """refs = [x_0, gT_0, aw_0, ..., x_{n-1}, gT_{n-1}, aw_{n-1}, bias, out]

      x_i  : (bblk, Cin_i*H_i, W_i)   free NCHW reshape of the i-th feature map
      gT_i : (Cin_i*H_i, Cout*Ht)     kron(wf_i, Ah_i^T): folded 1x1 convs x H-resize
      aw_i : (Wt, W_i)                W-axis bilinear matrix
      bias : (1, Cout*Ht)             all biases folded through the fusion conv (f32)
      out  : (bblk, Wt, Cout*Ht)      transposed output -> lane axis = Cout*Ht
    """
    def kernel(*refs):
        out_ref = refs[-1]
        bias = refs[-2][...]                                   # (1, Cout*Ht) f32
        for bb in range(bblk):                                 # static unroll, bblk small
            acc = None
            for i in range(num_scales):                        # static unroll over scales
                x_b = refs[3 * i][bb]                          # (Cin*H, W)
                gT = refs[3 * i + 1][...]                      # (Cin*H, Cout*Ht)
                aw = refs[3 * i + 2][...]                      # (Wt, W)
                if g_first[i]:
                    # Upsampled scale (W <= Wt): big contraction at native width W,
                    # outputting Cout*Ht on the lane axis; then the tiny W-resize.
                    z = lax.dot_general(                       # (W, Cout*Ht)
                        x_b, gT, (((0,), (0,)), ((), ())),
                        preferred_element_type=jnp.float32)
                    contrib = jnp.dot(aw, z.astype(aw.dtype),  # (Wt, Cout*Ht)
                                      preferred_element_type=jnp.float32)
                else:
                    # Downsampled scale: shrink W first, then the big contraction.
                    y = lax.dot_general(                       # (Wt, Cin*H)
                        aw, x_b, (((1,), (1,)), ((), ())),
                        preferred_element_type=jnp.float32)
                    contrib = jnp.dot(y.astype(gT.dtype), gT,  # (Wt, Cout*Ht)
                                      preferred_element_type=jnp.float32)
                acc = contrib if acc is None else acc + contrib
            out_ref[bb] = (acc + bias).astype(out_ref.dtype)
    return kernel


# ------------------------------ Module wrapper ------------------------------

class MultiScaleFusionPallas:
    def __init__(self, in_channels_list, out_channels, target_size, key,
                 compute_dtype=jnp.bfloat16):
        self.target_size = tuple(target_size)
        self.out_channels = out_channels
        self.in_channels_list = list(in_channels_list)
        self.compute_dtype = compute_dtype
        keys = jax.random.split(key, 2 * len(in_channels_list) + 2)
        self.conv_w, self.conv_b = [], []
        for i, c_in in enumerate(in_channels_list):
            bound = 1.0 / math.sqrt(c_in)                      # fan_in of a 1x1 conv
            self.conv_w.append(jax.random.uniform(
                keys[2 * i], (c_in, out_channels), minval=-bound, maxval=bound,
                dtype=jnp.float32))
            self.conv_b.append(jax.random.uniform(
                keys[2 * i + 1], (1, out_channels), minval=-bound, maxval=bound,
                dtype=jnp.float32))
        fused_in = out_channels * len(in_channels_list)
        bound = 1.0 / math.sqrt(fused_in)
        self.fusion_w = jax.random.uniform(
            keys[-2], (fused_in, out_channels), minval=-bound, maxval=bound,
            dtype=jnp.float32)
        self.fusion_b = jax.random.uniform(
            keys[-1], (1, out_channels), minval=-bound, maxval=bound,
            dtype=jnp.float32)
        # Caches (weights are frozen after init; clear these if weights change).
        self._const_cache = {}     # spatial shapes -> (gT_list, aw_list, bias_row)
        self._fn_cache = {}        # (B, spatial shapes, dtype) -> jitted forward

    # -- host-side constant folding (cached) ---------------------------------
    def _constants(self, spatial_shapes):
        key = tuple(spatial_shapes)
        if key not in self._const_cache:
            Ht, Wt = self.target_size
            cout = self.out_channels
            fusion_w = np.asarray(self.fusion_w)                  # (N*Cout, Cout)
            bias = np.asarray(self.fusion_b).reshape(cout).astype(np.float64)
            gT_list, aw_list = [], []
            for i, ((H, W), cw, cb) in enumerate(
                    zip(spatial_shapes, self.conv_w, self.conv_b)):
                F_i = fusion_w[i * cout:(i + 1) * cout, :]        # (Cout, Cout)
                wf = np.asarray(cw) @ F_i                         # (Cin_i, Cout) folded conv
                bias = bias + np.asarray(cb).reshape(cout) @ F_i  # conv bias through fusion
                Ah = _bilinear_matrix(H, Ht)                      # (Ht, H)
                Aw = _bilinear_matrix(W, Wt)                      # (Wt, W)
                # GT_i[(ci,h),(c,t)] = wf[ci,c] * Ah[t,h] : folded conv x H-resize.
                # Kept as an explicit kron because Cin_i*H_i x Cout*Ht is tiny here;
                # for large shapes split it into two chained matmuls instead.
                gT_list.append(jnp.asarray(np.kron(wf, Ah.T).astype(np.float32)))
                aw_list.append(jnp.asarray(Aw.astype(np.float32)))
            bias_row = jnp.asarray(
                np.repeat(bias.astype(np.float32), Ht)[None, :])  # (1, Cout*Ht)
            self._const_cache[key] = (gT_list, aw_list, bias_row)
        return self._const_cache[key]

    # -- build + cache the jitted pallas forward for one static config --------
    def _forward_fn(self, B, spatial_shapes, dtype_name):
        key = (B, tuple(spatial_shapes), dtype_name)
        if key in self._fn_cache:
            return self._fn_cache[key]

        Ht, Wt = self.target_size
        cout = self.out_channels
        dtype = jnp.dtype(dtype_name)
        n = len(spatial_shapes)
        bblk = _pick_batch_block(B)
        nblk = B // bblk
        g_first = tuple(W <= Wt for (_, W) in spatial_shapes)
        kernel = _make_kernel(n, g_first, bblk)

        in_specs = []
        for (H, W), c_in in zip(spatial_shapes, self.in_channels_list):
            in_specs += [
                pl.BlockSpec((bblk, c_in * H, W), lambda b: (b, 0, 0)),
                # Constant operands: index_map is grid-invariant so they are DMA'd once.
                # (pipeline_mode=pl.Buffered(1) would halve their VMEM on v7x at scale.)
                pl.BlockSpec((c_in * H, cout * Ht), lambda b: (0, 0)),
                pl.BlockSpec((Wt, W), lambda b: (0, 0)),
            ]
        in_specs.append(pl.BlockSpec((1, cout * Ht), lambda b: (0, 0)))
        out_spec = pl.BlockSpec((bblk, Wt, cout * Ht), lambda b: (b, 0, 0))

        # VMEM footprint here is a few hundred KB (constants + tiles), far below the
        # scoped default on v5e/v6e/v7x.  For much larger shapes: add a Cin*H
        # reduction grid axis ("arbitrary") with a VMEM accumulator and set
        # vmem_limit_bytes explicitly.
        call = pl.pallas_call(
            kernel,
            out_shape=jax.ShapeDtypeStruct((B, Wt, cout * Ht), jnp.float32),
            grid=(nblk,),
            in_specs=in_specs,
            out_specs=out_spec,
            compiler_params=pltpu.CompilerParams(
                dimension_semantics=("parallel",)),   # megacore: batch blocks across TCs
        )

        def fwd(feats, gTs, aws, bias_row):
            inputs = []
            for feat, gT, aw in zip(feats, gTs, aws):
                Bf, C, H, W = feat.shape
                # Free reshape of NCHW; activations (and weights) cast to compute dtype.
                inputs += [feat.reshape(Bf, C * H, W).astype(dtype),
                           gT.astype(dtype), aw.astype(dtype)]
            inputs.append(bias_row)                               # bias stays f32
            out_t = call(*inputs)                                 # (B, Wt, Cout*Ht) f32
            # out_t[b, s, c*Ht + t] -> NCHW (B, Cout, Ht, Wt); tiny wrapper transpose.
            return out_t.reshape(B, Wt, cout, Ht).transpose(0, 2, 3, 1)

        fn = jax.jit(fwd)
        self._fn_cache[key] = fn
        return fn

    # -- forward --------------------------------------------------------------
    def __call__(self, feature_maps, compute_dtype=None):
        assert len(feature_maps) == len(self.in_channels_list)
        dtype = self.compute_dtype if compute_dtype is None else compute_dtype
        B = feature_maps[0].shape[0]
        spatial = tuple((f.shape[2], f.shape[3]) for f in feature_maps)
        gT_list, aw_list, bias_row = self._constants(spatial)
        fn = self._forward_fn(B, spatial, jnp.dtype(dtype).name)
        return fn(tuple(feature_maps), tuple(gT_list), tuple(aw_list), bias_row)

    # -- pure-JAX reference (mirrors the PyTorch module op-by-op, unfused) ----
    def reference(self, feature_maps):
        Ht, Wt = self.target_size
        procs = []
        for feat, w, b in zip(feature_maps, self.conv_w, self.conv_b):
            Bf, C, H, W = feat.shape
            proj = jnp.einsum('bchw,cd->bdhw', feat, w) + b.reshape(1, -1, 1, 1)
            Ah = jnp.asarray(_bilinear_matrix(H, Ht))
            Aw = jnp.asarray(_bilinear_matrix(W, Wt))
            procs.append(jnp.einsum('th,bdhw,sw->bdts', Ah, proj, Aw))
        fused = jnp.concatenate(procs, axis=1)
        return (jnp.einsum('bchw,cd->bdhw', fused, self.fusion_w)
                + self.fusion_b.reshape(1, -1, 1, 1))


if __name__ == "__main__":
    key = jax.random.PRNGKey(0)
    k_mod, k0, k1, k2 = jax.random.split(key, 4)

    in_channels_list = [4, 8, 16]
    out_channels = 8
    target_size = (16, 16)
    batch = 2

    module = MultiScaleFusionPallas(in_channels_list, out_channels, target_size, k_mod)

    feature_maps = [
        jax.random.normal(k0, (batch, 4, 16, 16), dtype=jnp.float32),
        jax.random.normal(k1, (batch, 8, 8, 8), dtype=jnp.float32),
        jax.random.normal(k2, (batch, 16, 4, 4), dtype=jnp.float32),
    ]

    ref = module.reference(feature_maps)

    # Exact-math path (f32 MXU): the algebraic fold only changes accumulation order.
    out_f32 = jax.block_until_ready(module(feature_maps, compute_dtype=jnp.float32))
    assert out_f32.shape == (batch, out_channels, *target_size), out_f32.shape
    assert jnp.allclose(out_f32, ref, atol=1e-4, rtol=1e-4), \
        float(jnp.max(jnp.abs(out_f32 - ref)))

    # Fast path (default): bf16 activations/weights, f32 accumulate -> bf16 tolerance.
    out_bf16 = jax.block_until_ready(module(feature_maps))
    assert out_bf16.shape == (batch, out_channels, *target_size), out_bf16.shape
    assert jnp.allclose(out_bf16, ref, atol=5e-2, rtol=5e-2), \
        float(jnp.max(jnp.abs(out_bf16 - ref)))

    print("KERNEL_OK")
</pallas_src>

<mosaic_0001>
module attributes {stable_mosaic.version = 11 : i64} {
  func.func @kernel(%arg0: i32, %arg1: memref<1x64x16xf32, #tpu.memory_space<vmem>>, %arg2: memref<64x128xf32, #tpu.memory_space<vmem>>, %arg3: memref<16x16xf32, #tpu.memory_space<vmem>>, %arg4: memref<1x64x8xf32, #tpu.memory_space<vmem>>, %arg5: memref<64x128xf32, #tpu.memory_space<vmem>>, %arg6: memref<16x8xf32, #tpu.memory_space<vmem>>, %arg7: memref<1x64x4xf32, #tpu.memory_space<vmem>>, %arg8: memref<64x128xf32, #tpu.memory_space<vmem>>, %arg9: memref<16x4xf32, #tpu.memory_space<vmem>>, %arg10: memref<1x128xf32, #tpu.memory_space<vmem>>, %arg11: memref<1x16x128xf32, #tpu.memory_space<vmem>>) attributes {dimension_semantics = [#tpu.dimension_semantics<parallel>], iteration_bounds = array<i64: 2>, scalar_prefetch = 0 : i64, scratch_operands = 0 : i64, tpu.core_type = #tpu.core_type<tc>, window_params = [{transform_indices = @transform_0, window_bounds = array<i64: 1, 64, 16>}, {pipeline_mode = #tpu.pipeline_mode<synchronous>, transform_indices = @transform_1, window_bounds = array<i64: 64, 128>}, {pipeline_mode = #tpu.pipeline_mode<synchronous>, transform_indices = @transform_2, window_bounds = array<i64: 16, 16>}, {transform_indices = @transform_3, window_bounds = array<i64: 1, 64, 8>}, {pipeline_mode = #tpu.pipeline_mode<synchronous>, transform_indices = @transform_4, window_bounds = array<i64: 64, 128>}, {pipeline_mode = #tpu.pipeline_mode<synchronous>, transform_indices = @transform_5, window_bounds = array<i64: 16, 8>}, {transform_indices = @transform_6, window_bounds = array<i64: 1, 64, 4>}, {pipeline_mode = #tpu.pipeline_mode<synchronous>, transform_indices = @transform_7, window_bounds = array<i64: 64, 128>}, {pipeline_mode = #tpu.pipeline_mode<synchronous>, transform_indices = @transform_8, window_bounds = array<i64: 16, 4>}, {pipeline_mode = #tpu.pipeline_mode<synchronous>, transform_indices = @transform_9, window_bounds = array<i64: 1, 128>}, {transform_indices = @transform_10, window_bounds = array<i64: 1, 16, 128>}]} {
    %c0 = arith.constant 0 : index
    %c0_0 = arith.constant 0 : index
    %0 = vector.load %arg10[%c0, %c0_0] : memref<1x128xf32, #tpu.memory_space<vmem>>, vector<1x128xf32>
    %c0_1 = arith.constant 0 : index
    %c0_2 = arith.constant 0 : index
    %c0_3 = arith.constant 0 : index
    %1 = vector.load %arg1[%c0_1, %c0_2, %c0_3] : memref<1x64x16xf32, #tpu.memory_space<vmem>>, vector<1x64x16xf32>
    %2 = vector.shape_cast %1 : vector<1x64x16xf32> to vector<64x16xf32>
    %c0_4 = arith.constant 0 : index
    %c0_5 = arith.constant 0 : index
    %3 = vector.load %arg2[%c0_4, %c0_5] : memref<64x128xf32, #tpu.memory_space<vmem>>, vector<64x128xf32>
    %c0_6 = arith.constant 0 : index
    %c0_7 = arith.constant 0 : index
    %4 = vector.load %arg3[%c0_6, %c0_7] : memref<16x16xf32, #tpu.memory_space<vmem>>, vector<16x16xf32>
    %cst = arith.constant dense<0.000000e+00> : vector<16x128xf32>
    %5 = tpu.matmul %2, %3, %cst {dimension_numbers = #tpu.dot_dimension_numbers<[0], [0], [1], [1], [0, 1, 1, 1], [], []>} : vector<64x16xf32>, vector<64x128xf32>, vector<16x128xf32> -> vector<16x128xf32>
    %cst_8 = arith.constant dense<0.000000e+00> : vector<16x128xf32>
    %6 = tpu.matmul %4, %5, %cst_8 {dimension_numbers = #tpu.dot_dimension_numbers<[1], [0], [0], [1], [0, 0, 1, 1], [], []>} : vector<16x16xf32>, vector<16x128xf32>, vector<16x128xf32> -> vector<16x128xf32>
    %c0_9 = arith.constant 0 : index
    %c0_10 = arith.constant 0 : index
    %c0_11 = arith.constant 0 : index
    %7 = vector.load %arg4[%c0_9, %c0_10, %c0_11] : memref<1x64x8xf32, #tpu.memory_space<vmem>>, vector<1x64x8xf32>
    %8 = vector.shape_cast %7 : vector<1x64x8xf32> to vector<64x8xf32>
    %c0_12 = arith.constant 0 : index
    %c0_13 = arith.constant 0 : index
    %9 = vector.load %arg5[%c0_12, %c0_13] : memref<64x128xf32, #tpu.memory_space<vmem>>, vector<64x128xf32>
    %c0_14 = arith.constant 0 : index
    %c0_15 = arith.constant 0 : index
    %10 = vector.load %arg6[%c0_14, %c0_15] : memref<16x8xf32, #tpu.memory_space<vmem>>, vector<16x8xf32>
    %cst_16 = arith.constant dense<0.000000e+00> : vector<8x128xf32>
    %11 = tpu.matmul %8, %9, %cst_16 {dimension_numbers = #tpu.dot_dimension_numbers<[0], [0], [1], [1], [0, 1, 1, 1], [], []>} : vector<64x8xf32>, vector<64x128xf32>, vector<8x128xf32> -> vector<8x128xf32>
    %cst_17 = arith.constant dense<0.000000e+00> : vector<16x128xf32>
    %12 = tpu.matmul %10, %11, %cst_17 {dimension_numbers = #tpu.dot_dimension_numbers<[1], [0], [0], [1], [0, 0, 1, 1], [], []>} : vector<16x8xf32>, vector<8x128xf32>, vector<16x128xf32> -> vector<16x128xf32>
    %13 = arith.addf %6, %12 : vector<16x128xf32>
    %c0_18 = arith.constant 0 : index
    %c0_19 = arith.constant 0 : index
    %c0_20 = arith.constant 0 : index
    %14 = vector.load %arg7[%c0_18, %c0_19, %c0_20] : memref<1x64x4xf32, #tpu.memory_space<vmem>>, vector<1x64x4xf32>
    %15 = vector.shape_cast %14 : vector<1x64x4xf32> to vector<64x4xf32>
    %c0_21 = arith.constant 0 : index
    %c0_22 = arith.constant 0 : index
    %16 = vector.load %arg8[%c0_21, %c0_22] : memref<64x128xf32, #tpu.memory_space<vmem>>, vector<64x128xf32>
    %c0_23 = arith.constant 0 : index
    %c0_24 = arith.constant 0 : index
    %17 = vector.load %arg9[%c0_23, %c0_24] : memref<16x4xf32, #tpu.memory_space<vmem>>, vector<16x4xf32>
    %cst_25 = arith.constant dense<0.000000e+00> : vector<4x128xf32>
    %18 = tpu.matmul %15, %16, %cst_25 {dimension_numbers = #tpu.dot_dimension_numbers<[0], [0], [1], [1], [0, 1, 1, 1], [], []>} : vector<64x4xf32>, vector<64x128xf32>, vector<4x128xf32> -> vector<4x128xf32>
    %cst_26 = arith.constant dense<0.000000e+00> : vector<16x128xf32>
    %19 = tpu.matmul %17, %18, %cst_26 {dimension_numbers = #tpu.dot_dimension_numbers<[1], [0], [0], [1], [0, 0, 1, 1], [], []>} : vector<16x4xf32>, vector<4x128xf32>, vector<16x128xf32> -> vector<16x128xf32>
    %20 = arith.addf %13, %19 : vector<16x128xf32>
    %21 = vector.broadcast %0 : vector<1x128xf32> to vector<16x128xf32>
    %22 = arith.addf %20, %21 : vector<16x128xf32>
    %c0_27 = arith.constant 0 : index
    %c0_28 = arith.constant 0 : index
    %c0_29 = arith.constant 0 : index
    %23 = vector.load %arg11[%c0_27, %c0_28, %c0_29] : memref<1x16x128xf32, #tpu.memory_space<vmem>>, vector<1x16x128xf32>
    %24 = vector.shape_cast %23 : vector<1x16x128xf32> to vector<16x128xf32>
    %25 = vector.shape_cast %22 : vector<16x128xf32> to vector<1x16x128xf32>
    tpu.vector_store %arg11[%c0_27, %c0_28, %c0_29], %25 {strides = array<i32>} : memref<1x16x128xf32, #tpu.memory_space<vmem>>, vector<1x16x128xf32>,
    return
  }
  func.func @transform_0(%arg0: i32) -> (i32, i32, i32) {
    %c0_i32 = arith.constant 0 : i32
    %c0_i32_0 = arith.constant 0 : i32
    %c0_i32_1 = arith.constant 0 : i32
    return %arg0, %c0_i32, %c0_i32_0 : i32, i32, i32
  }
  func.func @transform_1(%arg0: i32) -> (i32, i32) {
    %c0_i32 = arith.constant 0 : i32
    %c0_i32_0 = arith.constant 0 : i32
    %c0_i32_1 = arith.constant 0 : i32
    return %c0_i32, %c0_i32_0 : i32, i32
  }
  func.func @transform_2(%arg0: i32) -> (i32, i32) {
    %c0_i32 = arith.constant 0 : i32
    %c0_i32_0 = arith.constant 0 : i32
    %c0_i32_1 = arith.constant 0 : i32
    return %c0_i32, %c0_i32_0 : i32, i32
  }
  func.func @transform_3(%arg0: i32) -> (i32, i32, i32) {
    %c0_i32 = arith.constant 0 : i32
    %c0_i32_0 = arith.constant 0 : i32
    %c0_i32_1 = arith.constant 0 : i32
    return %arg0, %c0_i32, %c0_i32_0 : i32, i32, i32
  }
  func.func @transform_4(%arg0: i32) -> (i32, i32) {
    %c0_i32 = arith.constant 0 : i32
    %c0_i32_0 = arith.constant 0 : i32
    %c0_i32_1 = arith.constant 0 : i32
    return %c0_i32, %c0_i32_0 : i32, i32
  }
  func.func @transform_5(%arg0: i32) -> (i32, i32) {
    %c0_i32 = arith.constant 0 : i32
    %c0_i32_0 = arith.constant 0 : i32
    %c0_i32_1 = arith.constant 0 : i32
    return %c0_i32, %c0_i32_0 : i32, i32
  }
  func.func @transform_6(%arg0: i32) -> (i32, i32, i32) {
    %c0_i32 = arith.constant 0 : i32
    %c0_i32_0 = arith.constant 0 : i32
    %c0_i32_1 = arith.constant 0 : i32
    return %arg0, %c0_i32, %c0_i32_0 : i32, i32, i32
  }
  func.func @transform_7(%arg0: i32) -> (i32, i32) {
    %c0_i32 = arith.constant 0 : i32
    %c0_i32_0 = arith.constant 0 : i32
    %c0_i32_1 = arith.constant 0 : i32
    return %c0_i32, %c0_i32_0 : i32, i32
  }
  func.func @transform_8(%arg0: i32) -> (i32, i32) {
    %c0_i32 = arith.constant 0 : i32
    %c0_i32_0 = arith.constant 0 : i32
    %c0_i32_1 = arith.constant 0 : i32
    return %c0_i32, %c0_i32_0 : i32, i32
  }
  func.func @transform_9(%arg0: i32) -> (i32, i32) {
    %c0_i32 = arith.constant 0 : i32
    %c0_i32_0 = arith.constant 0 : i32
    %c0_i32_1 = arith.constant 0 : i32
    return %c0_i32, %c0_i32_0 : i32, i32
  }
  func.func @transform_10(%arg0: i32) -> (i32, i32, i32) {
    %c0_i32 = arith.constant 0 : i32
    %c0_i32_0 = arith.constant 0 : i32
    %c0_i32_1 = arith.constant 0 : i32
    return %arg0, %c0_i32, %c0_i32_0 : i32, i32, i32
  }
}

</mosaic_0001>

<llo_original>
// kernel: fwd.1
$region0: #{fwd.1}
  #allocation0 [shape = 'u32[]', space=smem, size = 0x4, offset = 0x4, fixed_abs, tag = 'smem constant byte address 0x4 - core index']
  #allocation1 [shape = 'u32[72,128]{1,0:T(1,128)}', space=vmem, size = 0x9000, scoped, tag = 'internal scratch']
  %s0 = inlined_call_operand.vmem [shape: f32[2,64,16], index: 0, kind: input, shape index: {}]
  %s1 = inlined_call_operand.hbm [shape: f32[64,128], index: 1, kind: input, shape index: {}]
  %s2 = inlined_call_operand.vmem [shape: f32[16,16], index: 2, kind: input, shape index: {}]
  %s3 = inlined_call_operand.hbm [shape: f32[2,64,8], index: 3, kind: input, shape index: {}]
  %s4 = inlined_call_operand.hbm [shape: f32[64,128], index: 4, kind: input, shape index: {}]
  %s5 = inlined_call_operand.vmem [shape: f32[16,8], index: 5, kind: input, shape index: {}]
  %s6 = inlined_call_operand.vmem [shape: f32[2,64,4], index: 6, kind: input, shape index: {}]
  %s7 = inlined_call_operand.hbm [shape: f32[64,128], index: 7, kind: input, shape index: {}]
  %s8 = inlined_call_operand.vmem [shape: f32[16,4], index: 8, kind: input, shape index: {}]
  %s9 = inlined_call_operand.vmem [shape: f32[1,128], index: 9, kind: input, shape index: {}]
  %s10 = inlined_call_operand.vmem [shape: f32[2,16,128], index: 10, kind: output, shape index: {}]
  %s11 = sld [smem:[#allocation0]]
  $region89: #{fwd.1} parent=0
    _
  %s13 = ssub.s32 1, %s11
  %s14 = scalar_select 0, %s13, %s11
  $region1: #{fwd.1} parent=0
    #allocation2 [shape = 'u8[32768]{0}', space=vmem, size = 0x8000, scoped, tag = 'input window, operand 1, single buffered']
    #allocation3 [shape = 's32[2]{0}', space=sflag, size = 0x8, scoped, tag = 'scoped memory for fwd.1']
    #allocation4 [shape = 'u8[65536]{0}', space=vmem, size = 0x10000, scoped, tag = 'input window, operand 3']
    #allocation5 [shape = 's32[2]{0}', space=sflag, size = 0x8, scoped, tag = 'scoped memory for fwd.1']
    #allocation6 [shape = 'u8[32768]{0}', space=vmem, size = 0x8000, scoped, tag = 'input window, operand 4, single buffered']
    #allocation7 [shape = 'u8[32768]{0}', space=vmem, size = 0x8000, scoped, tag = 'input window, operand 7, single buffered']
    #allocation8 [shape = 's32[1]{0}', space=sflag, size = 0x4, scoped, tag = 'scoped memory for fwd.1']
    %15 = vsyncpa [#allocation3], 0
    %16 = vsyncpa [#allocation5], 0
    %s17 = scalar_lea.sflag [#allocation5], 1
    %18 = vsyncpa %s17, 0
    %19 = vsyncpa [#allocation8], 0
    loop: start=0, step=1, limit=4
    $region2: #{fwd.1} parent=1 // loop_pre_header
      _
    $region3: #{fwd.1} parent=1 // loop_header
      %s21 = sphi 0, %s25
      %p22 = scmp.ge.s32.totalorder %s21, 4
      %s31 = sphi 0, %s33
      %s34 = sphi 0, %s31
      %s35 = sphi 0, %s34
      %s51 = sphi 0, %s35
      %s55 = sphi 0, %s55
      %s57 = sphi 0, %s55
      %s58 = sphi 0, %s57
      %s72 = sphi 0, %s58
      %s76 = sphi 0, %s76
      %s78 = sphi 0, %s76
      %s79 = sphi 0, %s78
      %s93 = sphi 0, %s79
      %s99 = sphi 0, %s101
      %s102 = sphi 0, %s99
      %s103 = sphi 0, %s102
      %s119 = sphi 0, %s103
      %s123 = sphi 0, %s123
      %s125 = sphi 0, %s123
      %s126 = sphi 0, %s125
      %s140 = sphi 0, %s126
      %s144 = sphi 0, %s144
      %s146 = sphi 0, %s144
      %s147 = sphi 0, %s146
      %s161 = sphi 0, %s147
      %s167 = sphi 0, %s169
      %s170 = sphi 0, %s167
      %s171 = sphi 0, %s170
      %s187 = sphi 0, %s171
      %s191 = sphi 0, %s191
      %s193 = sphi 0, %s191
      %s194 = sphi 0, %s193
      %s208 = sphi 0, %s194
      %s212 = sphi 0, %s212
      %s214 = sphi 0, %s212
      %s215 = sphi 0, %s214
      %s229 = sphi 0, %s215
      %s233 = sphi 0, %s233
      %s235 = sphi 0, %s233
      %s236 = sphi 0, %s235
      %s250 = sphi 0, %s236
      %s256 = sphi 0, %s258
      %s259 = sphi 0, %s256
      %s260 = sphi 0, %s259
      %s276 = sphi 0, %s260
    $region4: #{fwd.1} parent=1 // loop_header_branch
      %24 = sbr.rel (%p22) target = $region8
    $region5: #{fwd.1} parent=1 // loop_body
      %s26 = ssub.s32 %s21, 1
      %s27 = ssub.s32 %s21, 2
      %s28 = sadd.s32 %s21, 1
      %s29 = ssub.s32 %s21, %s28
      %p30 = scmp.eq.s32.totalorder %s29, 0
      %s32 = sadd.s32 %s31, 1
      %s33 = scalar_select %p30, %s31, %s32
      %p36 = pneg %p30
      %p37 = scmp.eq.s32.totalorder %s21, 1
      %p38 = por %p36, %p37
      %p39 = scmp.ne.s32.totalorder %s31, %s34
      %p40 = scmp.eq.s32.totalorder %s21, 0
      %p41 = por %p39, %p40
      %p42 = scmp.ne.s32.totalorder %s31, %s34
      %p43 = scmp.eq.s32.totalorder %s26, 1
      %p44 = por %p42, %p43
      %p45 = scmp.ne.s32.totalorder %s34, %s35
      %p46 = scmp.eq.s32.totalorder %s26, 0
      %p47 = por %p45, %p46
      %p48 = scmp.ne.s32.totalorder %s34, %s35
      %p49 = scmp.eq.s32.totalorder %s27, 1
      %p50 = por %p48, %p49
      %p52 = scmp.ne.s32.totalorder %s35, %s51
      %p53 = scmp.eq.s32.totalorder %s27, 0
      %p54 = por %p52, %p53
      %s56 = sadd.s32 %s55, 1
      %p59 = scmp.eq.s32.totalorder %s21, 1
      %p60 = scmp.ne.s32.totalorder %s55, %s57
      %p61 = scmp.eq.s32.totalorder %s21, 0
      %p62 = por %p60, %p61
      %p63 = scmp.ne.s32.totalorder %s55, %s57
      %p64 = scmp.eq.s32.totalorder %s26, 1
      %p65 = por %p63, %p64
      %p66 = scmp.ne.s32.totalorder %s57, %s58
      %p67 = scmp.eq.s32.totalorder %s26, 0
      %p68 = por %p66, %p67
      %p69 = scmp.ne.s32.totalorder %s57, %s58
      %p70 = scmp.eq.s32.totalorder %s27, 1
      %p71 = por %p69, %p70
      %p73 = scmp.ne.s32.totalorder %s58, %s72
      %p74 = scmp.eq.s32.totalorder %s27, 0
      %p75 = por %p73, %p74
      %s77 = sadd.s32 %s76, 1
      %p80 = scmp.eq.s32.totalorder %s21, 1
      %p81 = scmp.ne.s32.totalorder %s76, %s78
      %p82 = scmp.eq.s32.totalorder %s21, 0
      %p83 = por %p81, %p82
      %p84 = scmp.ne.s32.totalorder %s76, %s78
      %p85 = scmp.eq.s32.totalorder %s26, 1
      %p86 = por %p84, %p85
      %p87 = scmp.ne.s32.totalorder %s78, %s79
      %p88 = scmp.eq.s32.totalorder %s26, 0
      %p89 = por %p87, %p88
      %p90 = scmp.ne.s32.totalorder %s78, %s79
      %p91 = scmp.eq.s32.totalorder %s27, 1
      %p92 = por %p90, %p91
      %p94 = scmp.ne.s32.totalorder %s79, %s93
      %p95 = scmp.eq.s32.totalorder %s27, 0
      %p96 = por %p94, %p95
      %s97 = ssub.s32 %s21, %s28
      %p98 = scmp.eq.s32.totalorder %s97, 0
      %s100 = sadd.s32 %s99, 1
      %s101 = scalar_select %p98, %s99, %s100
      %p104 = pneg %p98
      %p105 = scmp.eq.s32.totalorder %s21, 1
      %p106 = por %p104, %p105
      %p107 = scmp.ne.s32.totalorder %s99, %s102
      %p108 = scmp.eq.s32.totalorder %s21, 0
      %p109 = por %p107, %p108
      %p110 = scmp.ne.s32.totalorder %s99, %s102
      %p111 = scmp.eq.s32.totalorder %s26, 1
      %p112 = por %p110, %p111
      %p113 = scmp.ne.s32.totalorder %s102, %s103
      %p114 = scmp.eq.s32.totalorder %s26, 0
      %p115 = por %p113, %p114
      %p116 = scmp.ne.s32.totalorder %s102, %s103
      %p117 = scmp.eq.s32.totalorder %s27, 1
      %p118 = por %p116, %p117
      %p120 = scmp.ne.s32.totalorder %s103, %s119
      %p121 = scmp.eq.s32.totalorder %s27, 0
      %p122 = por %p120, %p121
      %s124 = sadd.s32 %s123, 1
      %p127 = scmp.eq.s32.totalorder %s21, 1
      %p128 = scmp.ne.s32.totalorder %s123, %s125
      %p129 = scmp.eq.s32.totalorder %s21, 0
      %p130 = por %p128, %p129
      %p131 = scmp.ne.s32.totalorder %s123, %s125
      %p132 = scmp.eq.s32.totalorder %s26, 1
      %p133 = por %p131, %p132
      %p134 = scmp.ne.s32.totalorder %s125, %s126
      %p135 = scmp.eq.s32.totalorder %s26, 0
      %p136 = por %p134, %p135
      %p137 = scmp.ne.s32.totalorder %s125, %s126
      %p138 = scmp.eq.s32.totalorder %s27, 1
      %p139 = por %p137, %p138
      %p141 = scmp.ne.s32.totalorder %s126, %s140
      %p142 = scmp.eq.s32.totalorder %s27, 0
      %p143 = por %p141, %p142
      %s145 = sadd.s32 %s144, 1
      %p148 = scmp.eq.s32.totalorder %s21, 1
      %p149 = scmp.ne.s32.totalorder %s144, %s146
      %p150 = scmp.eq.s32.totalorder %s21, 0
      %p151 = por %p149, %p150
      %p152 = scmp.ne.s32.totalorder %s144, %s146
      %p153 = scmp.eq.s32.totalorder %s26, 1
      %p154 = por %p152, %p153
      %p155 = scmp.ne.s32.totalorder %s146, %s147
      %p156 = scmp.eq.s32.totalorder %s26, 0
      %p157 = por %p155, %p156
      %p158 = scmp.ne.s32.totalorder %s146, %s147
      %p159 = scmp.eq.s32.totalorder %s27, 1
      %p160 = por %p158, %p159
      %p162 = scmp.ne.s32.totalorder %s147, %s161
      %p163 = scmp.eq.s32.totalorder %s27, 0
      %p164 = por %p162, %p163
      %s165 = ssub.s32 %s21, %s28
      %p166 = scmp.eq.s32.totalorder %s165, 0
      %s168 = sadd.s32 %s167, 1
      %s169 = scalar_select %p166, %s167, %s168
      %p172 = pneg %p166
      %p173 = scmp.eq.s32.totalorder %s21, 1
      %p174 = por %p172, %p173
      %p175 = scmp.ne.s32.totalorder %s167, %s170
      %p176 = scmp.eq.s32.totalorder %s21, 0
      %p177 = por %p175, %p176
      %p178 = scmp.ne.s32.totalorder %s167, %s170
      %p179 = scmp.eq.s32.totalorder %s26, 1
      %p180 = por %p178, %p179
      %p181 = scmp.ne.s32.totalorder %s170, %s171
      %p182 = scmp.eq.s32.totalorder %s26, 0
      %p183 = por %p181, %p182
      %p184 = scmp.ne.s32.totalorder %s170, %s171
      %p185 = scmp.eq.s32.totalorder %s27, 1
      %p186 = por %p184, %p185
      %p188 = scmp.ne.s32.totalorder %s171, %s187
      %p189 = scmp.eq.s32.totalorder %s27, 0
      %p190 = por %p188, %p189
      %s192 = sadd.s32 %s191, 1
      %p195 = scmp.eq.s32.totalorder %s21, 1
      %p196 = scmp.ne.s32.totalorder %s191, %s193
      %p197 = scmp.eq.s32.totalorder %s21, 0
      %p198 = por %p196, %p197
      %p199 = scmp.ne.s32.totalorder %s191, %s193
      %p200 = scmp.eq.s32.totalorder %s26, 1
      %p201 = por %p199, %p200
      %p202 = scmp.ne.s32.totalorder %s193, %s194
      %p203 = scmp.eq.s32.totalorder %s26, 0
      %p204 = por %p202, %p203
      %p205 = scmp.ne.s32.totalorder %s193, %s194
      %p206 = scmp.eq.s32.totalorder %s27, 1
      %p207 = por %p205, %p206
      %p209 = scmp.ne.s32.totalorder %s194, %s208
      %p210 = scmp.eq.s32.totalorder %s27, 0
      %p211 = por %p209, %p210
      %s213 = sadd.s32 %s212, 1
      %p216 = scmp.eq.s32.totalorder %s21, 1
      %p217 = scmp.ne.s32.totalorder %s212, %s214
      %p218 = scmp.eq.s32.totalorder %s21, 0
      %p219 = por %p217, %p218
      %p220 = scmp.ne.s32.totalorder %s212, %s214
      %p221 = scmp.eq.s32.totalorder %s26, 1
      %p222 = por %p220, %p221
      %p223 = scmp.ne.s32.totalorder %s214, %s215
      %p224 = scmp.eq.s32.totalorder %s26, 0
      %p225 = por %p223, %p224
      %p226 = scmp.ne.s32.totalorder %s214, %s215
      %p227 = scmp.eq.s32.totalorder %s27, 1
      %p228 = por %p226, %p227
      %p230 = scmp.ne.s32.totalorder %s215, %s229
      %p231 = scmp.eq.s32.totalorder %s27, 0
      %p232 = por %p230, %p231
      %s234 = sadd.s32 %s233, 1
      %p237 = scmp.eq.s32.totalorder %s21, 1
      %p238 = scmp.ne.s32.totalorder %s233, %s235
      %p239 = scmp.eq.s32.totalorder %s21, 0
      %p240 = por %p238, %p239
      %p241 = scmp.ne.s32.totalorder %s233, %s235
      %p242 = scmp.eq.s32.totalorder %s26, 1
      %p243 = por %p241, %p242
      %p244 = scmp.ne.s32.totalorder %s235, %s236
      %p245 = scmp.eq.s32.totalorder %s26, 0
      %p246 = por %p244, %p245
      %p247 = scmp.ne.s32.totalorder %s235, %s236
      %p248 = scmp.eq.s32.totalorder %s27, 1
      %p249 = por %p247, %p248
      %p251 = scmp.ne.s32.totalorder %s236, %s250
      %p252 = scmp.eq.s32.totalorder %s27, 0
      %p253 = por %p251, %p252
      %s254 = ssub.s32 %s21, %s28
      %p255 = scmp.eq.s32.totalorder %s254, 0
      %s257 = sadd.s32 %s256, 1
      %s258 = scalar_select %p255, %s256, %s257
      %p261 = pneg %p255
      %p262 = scmp.eq.s32.totalorder %s21, 1
      %p263 = por %p261, %p262
      %p264 = scmp.ne.s32.totalorder %s256, %s259
      %p265 = scmp.eq.s32.totalorder %s21, 0
      %p266 = por %p264, %p265
      %p267 = scmp.ne.s32.totalorder %s256, %s259
      %p268 = scmp.eq.s32.totalorder %s26, 1
      %p269 = por %p267, %p268
      %p270 = scmp.ne.s32.totalorder %s259, %s260
      %p271 = scmp.eq.s32.totalorder %s26, 0
      %p272 = por %p270, %p271
      %p273 = scmp.ne.s32.totalorder %s259, %s260
      %p274 = scmp.eq.s32.totalorder %s27, 1
      %p275 = por %p273, %p274
      %p277 = scmp.ne.s32.totalorder %s260, %s276
      %p278 = scmp.eq.s32.totalorder %s27, 0
      %p279 = por %p277, %p278
      %p280 = scmp.le.s32.totalorder 1, %s21
      %p281 = scmp.lt.s32.totalorder %s21, 3
      %p282 = pnand %p280, %p281
      %p283 = pneg %p282
      // Predicated region
      $region9: #{fwd.1} parent=5 // pred_check
        _
      $region10: #{fwd.1} parent=5 // pred_check_branch
        %285 = sbr.rel (%p282) target = $region12
      $region11: #{fwd.1} parent=5 // pred_region
        %s286 = ssub.s32 %s21, 1
        // Predicated region
        $region13: #{fwd.1} parent=11 // pred_check
          %p287 = pneg %p68
        $region14: #{fwd.1} parent=11 // pred_check_branch
          %289 = sbr.rel (%p287) target = $region16
        $region15: #{fwd.1} parent=11 // pred_region
          %291 = vsyncadd [#allocation3], 0
          %s292 = sshll.u32 %s1, 4
          %s293 = int_to_ptr.hbm [resolvable:$true] %s292
          %s294 = sshll.u32 [#allocation2], 4
          %s295 = int_to_ptr.vmem [resolvable:$true] %s294
          %300 = dma.hbm_to_vmem [thread:$0]  %s293, 1024, %s295, [#allocation3], 128, 128, 8
        $region16: #{fwd.1} parent=11 // pred_fallthru
          _
        // Predicated region
        $region17: #{fwd.1} parent=11 // pred_check
          %p301 = pneg %p89
        $region18: #{fwd.1} parent=11 // pred_check_branch
          %303 = sbr.rel (%p301) target = $region20
        $region19: #{fwd.1} parent=11 // pred_region
          _
        $region20: #{fwd.1} parent=11 // pred_fallthru
          _
        // Predicated region
        $region21: #{fwd.1} parent=11 // pred_check
          %p304 = pneg %p136
        $region22: #{fwd.1} parent=11 // pred_check_branch
          %306 = sbr.rel (%p304) target = $region24
        $region23: #{fwd.1} parent=11 // pred_region
          %308 = vsyncadd [#allocation5], 0
          %s309 = sshll.u32 %s4, 4
          %s310 = int_to_ptr.hbm [resolvable:$true] %s309
          %s311 = sshll.u32 [#allocation6], 4
          %s312 = int_to_ptr.vmem [resolvable:$true] %s311
          %317 = dma.hbm_to_vmem [thread:$0]  %s310, 1024, %s312, [#allocation5], 128, 128, 8
        $region24: #{fwd.1} parent=11 // pred_fallthru
          _
        // Predicated region
        $region25: #{fwd.1} parent=11 // pred_check
          %p318 = pneg %p157
        $region26: #{fwd.1} parent=11 // pred_check_branch
          %320 = sbr.rel (%p318) target = $region28
        $region27: #{fwd.1} parent=11 // pred_region
          _
        $region28: #{fwd.1} parent=11 // pred_fallthru
          _
        // Predicated region
        $region29: #{fwd.1} parent=11 // pred_check
          %p321 = pneg %p204
        $region30: #{fwd.1} parent=11 // pred_check_branch
          %323 = sbr.rel (%p321) target = $region32
        $region31: #{fwd.1} parent=11 // pred_region
          %325 = vsyncadd [#allocation8], 0
          %s326 = sshll.u32 %s7, 4
          %s327 = int_to_ptr.hbm [resolvable:$true] %s326
          %s328 = sshll.u32 [#allocation7], 4
          %s329 = int_to_ptr.vmem [resolvable:$true] %s328
          %334 = dma.hbm_to_vmem [thread:$0]  %s327, 1024, %s329, [#allocation8], 128, 128, 8
        $region32: #{fwd.1} parent=11 // pred_fallthru
          _
        // Predicated region
        $region33: #{fwd.1} parent=11 // pred_check
          %p335 = pneg %p225
        $region34: #{fwd.1} parent=11 // pred_check_branch
          %337 = sbr.rel (%p335) target = $region36
        $region35: #{fwd.1} parent=11 // pred_region
          _
        $region36: #{fwd.1} parent=11 // pred_fallthru
          _
        // Predicated region
        $region37: #{fwd.1} parent=11 // pred_check
          %p338 = pneg %p246
        $region38: #{fwd.1} parent=11 // pred_check_branch
          %340 = sbr.rel (%p338) target = $region40
        $region39: #{fwd.1} parent=11 // pred_region
          _
        $region40: #{fwd.1} parent=11 // pred_fallthru
          _
      $region12: #{fwd.1} parent=5 // pred_fallthru
        _
      %p341 = scmp.lt.s32.totalorder %s21, 2
      // Predicated region
      $region41: #{fwd.1} parent=5 // pred_check
        %p342 = pneg %p341
      $region42: #{fwd.1} parent=5 // pred_check_branch
        %344 = sbr.rel (%p342) target = $region44
      $region43: #{fwd.1} parent=5 // pred_region
        // Predicated region
        $region45: #{fwd.1} parent=43 // pred_check
          %p345 = pneg %p41
        $region46: #{fwd.1} parent=43 // pred_check_branch
          %347 = sbr.rel (%p345) target = $region48
        $region47: #{fwd.1} parent=43 // pred_region
          %p348 = scmp.lt.s32.totalorder %s21, 1
          %s349 = scalar_select %p348, %s21, 1
          %s350 = smul.addr %s349, 8
          %s351 = smul.addr %s350, 8
          %s352 = scalar_lea.vmem %s0, %s351
        $region48: #{fwd.1} parent=43 // pred_fallthru
          _
        // Predicated region
        $region49: #{fwd.1} parent=43 // pred_check
          %p353 = pneg %p109
        $region50: #{fwd.1} parent=43 // pred_check_branch
          %355 = sbr.rel (%p353) target = $region52
        $region51: #{fwd.1} parent=43 // pred_region
          %s356 = sand.u32 %s21, 1
          %s357 = scalar_lea.sflag [#allocation5], %s356
          %s358 = sand.u32 %s99, 1
          %s359 = smul.addr %s358, 64
          %s360 = scalar_lea.vmem [#allocation4], %s359
          %362 = vsyncadd %s357, 0
          %s363 = smul.addr %s21, 8
          %s364 = smul.addr %s363, 8
          %s365 = scalar_lea.hbm %s3, %s364
          %s366 = sshll.u32 %s365, 4
          %s367 = int_to_ptr.hbm [resolvable:$true] %s366
          %s368 = sshll.u32 %s360, 4
          %s369 = int_to_ptr.vmem [resolvable:$true] %s368
          %374 = dma.hbm_to_vmem [thread:$0]  %s367, 1024, %s369, %s357, 128, 128, 8
        $region52: #{fwd.1} parent=43 // pred_fallthru
          _
        // Predicated region
        $region53: #{fwd.1} parent=43 // pred_check
          %p375 = pneg %p177
        $region54: #{fwd.1} parent=43 // pred_check_branch
          %377 = sbr.rel (%p375) target = $region56
        $region55: #{fwd.1} parent=43 // pred_region
          %p378 = scmp.lt.s32.totalorder %s21, 1
          %s379 = scalar_select %p378, %s21, 1
          %s380 = smul.addr %s379, 8
          %s381 = smul.addr %s380, 8
          %s382 = scalar_lea.vmem %s6, %s381
        $region56: #{fwd.1} parent=43 // pred_fallthru
          _
      $region44: #{fwd.1} parent=5 // pred_fallthru
        _
      %p383 = scmp.le.s32.totalorder 1, %s21
      %p384 = scmp.lt.s32.totalorder %s21, 3
      %p385 = pnand %p383, %p384
      %p386 = pneg %p385
      // Predicated region
      $region57: #{fwd.1} parent=5 // pred_check
        _
      $region58: #{fwd.1} parent=5 // pred_check_branch
        %388 = sbr.rel (%p385) target = $region60
      $region59: #{fwd.1} parent=5 // pred_region
        %s389 = ssub.s32 %s21, 1
        // Predicated region
        $region61: #{fwd.1} parent=59 // pred_check
          %p390 = pneg %p68
        $region62: #{fwd.1} parent=59 // pred_check_branch
          %392 = sbr.rel (%p390) target = $region64
        $region63: #{fwd.1} parent=59 // pred_region
          %394 = dma.done [#allocation3], 1024
        $region64: #{fwd.1} parent=59 // pred_fallthru
          _
        %s395 = sand.u32 %s26, 1
        %s396 = scalar_lea.sflag [#allocation5], %s395
        %s397 = sand.u32 %s102, 1
        %s398 = smul.addr %s397, 64
        %s399 = scalar_lea.vmem [#allocation4], %s398
        // Predicated region
        $region65: #{fwd.1} parent=59 // pred_check
          %p400 = pneg %p115
        $region66: #{fwd.1} parent=59 // pred_check_branch
          %402 = sbr.rel (%p400) target = $region68
        $region67: #{fwd.1} parent=59 // pred_region
          %404 = dma.done %s396, 1024
        $region68: #{fwd.1} parent=59 // pred_fallthru
          _
        // Predicated region
        $region69: #{fwd.1} parent=59 // pred_check
          %p405 = pneg %p136
        $region70: #{fwd.1} parent=59 // pred_check_branch
          %407 = sbr.rel (%p405) target = $region72
        $region71: #{fwd.1} parent=59 // pred_region
          %409 = dma.done [#allocation5], 1024
        $region72: #{fwd.1} parent=59 // pred_fallthru
          _
        // Predicated region
        $region73: #{fwd.1} parent=59 // pred_check
          %p410 = pneg %p204
        $region74: #{fwd.1} parent=59 // pred_check_branch
          %412 = sbr.rel (%p410) target = $region76
        $region75: #{fwd.1} parent=59 // pred_region
          %414 = dma.done [#allocation8], 1024
        $region76: #{fwd.1} parent=59 // pred_fallthru
          _
        %p415 = scmp.lt.s32.totalorder %s26, 1
        %s416 = scalar_select %p415, %s26, 1
        %s417 = smul.addr %s416, 8
        %s418 = smul.addr %s417, 8
        %s419 = scalar_lea.vmem %s0, %s418
        %p420 = pneg %p47
        %p421 = pneg %p44
        %p422 = pneg %p68
        %p423 = pneg %p65
        %p424 = pneg %p89
        %p425 = pneg %p86
        %s426 = sand.u32 %s26, 1
        %s427 = scalar_lea.sflag [#allocation5], %s426
        %s428 = sand.u32 %s102, 1
        %s429 = smul.addr %s428, 64
        %s430 = scalar_lea.vmem [#allocation4], %s429
        %p431 = pneg %p115
        %p432 = pneg %p112
        %p433 = pneg %p136
        %p434 = pneg %p133
        %p435 = pneg %p157
        %p436 = pneg %p154
        %p437 = scmp.lt.s32.totalorder %s26, 1
        %s438 = scalar_select %p437, %s26, 1
        %s439 = smul.addr %s438, 8
        %s440 = smul.addr %s439, 8
        %s441 = scalar_lea.vmem %s6, %s440
        %p442 = pneg %p183
        %p443 = pneg %p180
        %p444 = pneg %p204
        %p445 = pneg %p201
        %p446 = pneg %p225
        %p447 = pneg %p222
        %p448 = pneg %p246
        %p449 = pneg %p243
        %p450 = pneg %p272
        %p451 = pneg %p269
        %p452 = scmp.lt.s32.totalorder %s26, 1
        %s453 = scalar_select %p452, %s26, 1
        %s454 = smul.addr %s453, 2
        %s455 = smul.addr %s454, 8
        %s456 = scalar_lea.vmem %s10, %s455
        %p457 = scmp.lt.s32.totalorder %s26, 1
        %s458 = scalar_select %p457, %s26, 1
        %s459 = smul.addr %s458, 8
        %s460 = smul.addr %s459, 8
        %s461 = scalar_lea.vmem %s0, %s460
        %p462 = scmp.lt.s32.totalorder %s26, 1
        %s463 = scalar_select %p462, %s26, 1
        %s464 = smul.addr %s463, 8
        %s465 = smul.addr %s464, 8
        %s466 = scalar_lea.vmem %s6, %s465
        %p467 = scmp.lt.s32.totalorder %s26, 1
        %s468 = scalar_select %p467, %s26, 1
        %s469 = smul.addr %s468, 2
        %s470 = smul.addr %s469, 8
        %s471 = scalar_lea.vmem %s10, %s470
        %v472 = vld [vmem:[%s9] sm:$0x1]
        %v473 = vld [vmem:[%s461] sm:$0xff]
        %v474 = vld [vmem:[%s461 + $0x8] sm:$0xff]
        %v475 = vld [vmem:[%s461 + $0x10] sm:$0xff]
        %v476 = vld [vmem:[%s461 + $0x18] sm:$0xff]
        %v477 = vld [vmem:[%s461 + $0x20] sm:$0xff]
        %v478 = vld [vmem:[%s461 + $0x28] sm:$0xff]
        %v479 = vld [vmem:[%s461 + $0x30] sm:$0xff]
        %v480 = vld [vmem:[%s461 + $0x38] sm:$0xff]
        %v481 = vld [vmem:[#allocation2] sm:$0xff]
        %v482 = vld [vmem:[#allocation2 + $0x8] sm:$0xff]
        %v483 = vld [vmem:[#allocation2 + $0x10] sm:$0xff]
        %v484 = vld [vmem:[#allocation2 + $0x18] sm:$0xff]
        %v485 = vld [vmem:[#allocation2 + $0x20] sm:$0xff]
        %v486 = vld [vmem:[#allocation2 + $0x28] sm:$0xff]
        %v487 = vld [vmem:[#allocation2 + $0x30] sm:$0xff]
        %v488 = vld [vmem:[#allocation2 + $0x38] sm:$0xff]
        %v489 = vld [vmem:[%s2] sm:$0xff]
        %v490 = vld [vmem:[%s2 + $0x8] sm:$0xff]
        %491 = vxpose.xlu0.b32.start [1/16] %v473, 128
        %492 = vxpose.xlu0.b32.cont [2/16] %v474, 128
        %493 = vxpose.xlu0.b32.cont [3/16] %v475, 128
        %494 = vxpose.xlu0.b32.cont [4/16] %v476, 128
        %495 = vxpose.xlu0.b32.cont [5/16] %v477, 128
        %496 = vxpose.xlu0.b32.cont [6/16] %v478, 128
        %497 = vxpose.xlu0.b32.cont [7/16] %v479, 128
        %498 = vxpose.xlu0.b32.cont [8/16] %v480, 128
        %499 = vxpose.xlu0.b32.cont [9/16] 0.0, 128
        %500 = vxpose.xlu0.b32.cont [10/16] 0.0, 128
        %501 = vxpose.xlu0.b32.cont [11/16] 0.0, 128
        %502 = vxpose.xlu0.b32.cont [12/16] 0.0, 128
        %503 = vxpose.xlu0.b32.cont [13/16] 0.0, 128
        %504 = vxpose.xlu0.b32.cont [14/16] 0.0, 128
        %505 = vxpose.xlu0.b32.cont [15/16] 0.0, 128
        %506 = vxpose.xlu0.b32.end [16/16] 0.0, 128
        %v507 = vpop.trf.xlu0
        %v508 = vpop.trf.xlu0
        %v509 = vpop.trf.xlu0
        %v510 = vpop.trf.xlu0
        %v511 = vpop.trf.xlu0
        %v512 = vpop.trf.xlu0
        %v513 = vpop.trf.xlu0
        %v514 = vpop.trf.xlu0
        %v515 = vpop.trf.xlu0
        %v516 = vpop.trf.xlu0
        %v517 = vpop.trf.xlu0
        %v518 = vpop.trf.xlu0
        %v519 = vpop.trf.xlu0
        %v520 = vpop.trf.xlu0
        %v521 = vpop.trf.xlu0
        %v522 = vpop.trf.xlu0
        %vm523 = vcmask 523264
        %v525 = vsel %vm523, %v507, 0
        %v528 = vsel %vm523, %v508, 0
        %530 = vmatpush.msra.mxu0 0.0
        %531 = vmatpush.msra.mxu0 0.0
        %532 = vmatpush.msra.mxu0 0.0
        %533 = vmatpush.msra.mxu0 0.0
        %534 = vmatpush.msra.mxu0 0.0
        %535 = vmatpush.msra.mxu0 0.0
        %536 = vmatpush.msra.mxu0 0.0
        %537 = vmatpush.msra.mxu0 0.0
        %538 = vmatpush.msra.mxu0 %v488
        %539 = vmatpush.msra.mxu0 %v487
        %540 = vmatpush.msra.mxu0 %v486
        %541 = vmatpush.msra.mxu0 %v485
        %542 = vmatpush.msra.mxu0 %v484
        %543 = vmatpush.msra.mxu0 %v483
        %544 = vmatpush.msra.mxu0 %v482
        %545 = vmatpush.msra.mxu0 %v481
        %546 = vmatmul.f32.gmra.mxu0 %v525
        %v547 = vpop.f32.mrf.mxu0
        %v548 = vadd.f32 0.0, %v547
        %549 = vmatmul.f32.gmra.mxu0 %v528
        %v550 = vpop.f32.mrf.mxu0
        %v551 = vadd.f32 0.0, %v550
        %552 = vdwg.mxu0
        %v553 = vld [vmem:[%s399] sm:$0xff]
        %v554 = vld [vmem:[%s399 + $0x8] sm:$0xff]
        %v555 = vld [vmem:[%s399 + $0x10] sm:$0xff]
        %v556 = vld [vmem:[%s399 + $0x18] sm:$0xff]
        %v557 = vld [vmem:[%s399 + $0x20] sm:$0xff]
        %v558 = vld [vmem:[%s399 + $0x28] sm:$0xff]
        %v559 = vld [vmem:[%s399 + $0x30] sm:$0xff]
        %v560 = vld [vmem:[%s399 + $0x38] sm:$0xff]
        %v561 = vld [vmem:[#allocation6] sm:$0xff]
        %v562 = vld [vmem:[#allocation6 + $0x8] sm:$0xff]
        %v563 = vld [vmem:[#allocation6 + $0x10] sm:$0xff]
        %v564 = vld [vmem:[#allocation6 + $0x18] sm:$0xff]
        %v565 = vld [vmem:[#allocation6 + $0x20] sm:$0xff]
        %v566 = vld [vmem:[#allocation6 + $0x28] sm:$0xff]
        %v567 = vld [vmem:[#allocation6 + $0x30] sm:$0xff]
        %v568 = vld [vmem:[#allocation6 + $0x38] sm:$0xff]
        %v569 = vld [vmem:[%s5] sm:$0xff]
        %v570 = vld [vmem:[%s5 + $0x8] sm:$0xff]
        %571 = vxpose.xlu0.b32.start [1/16] %v553, 128
        %572 = vxpose.xlu0.b32.cont [2/16] %v554, 128
        %573 = vxpose.xlu0.b32.cont [3/16] %v555, 128
        %574 = vxpose.xlu0.b32.cont [4/16] %v556, 128
        %575 = vxpose.xlu0.b32.cont [5/16] %v557, 128
        %576 = vxpose.xlu0.b32.cont [6/16] %v558, 128
        %577 = vxpose.xlu0.b32.cont [7/16] %v559, 128
        %578 = vxpose.xlu0.b32.cont [8/16] %v560, 128
        %579 = vxpose.xlu0.b32.cont [9/16] 0.0, 128
        %580 = vxpose.xlu0.b32.cont [10/16] 0.0, 128
        %581 = vxpose.xlu0.b32.cont [11/16] 0.0, 128
        %582 = vxpose.xlu0.b32.cont [12/16] 0.0, 128
        %583 = vxpose.xlu0.b32.cont [13/16] 0.0, 128
        %584 = vxpose.xlu0.b32.cont [14/16] 0.0, 128
        %585 = vxpose.xlu0.b32.cont [15/16] 0.0, 128
        %586 = vxpose.xlu0.b32.end [16/16] 0.0, 128
        %v587 = vpop.trf.xlu0
        %v588 = vpop.trf.xlu0
        %v589 = vpop.trf.xlu0
        %v590 = vpop.trf.xlu0
        %v591 = vpop.trf.xlu0
        %v592 = vpop.trf.xlu0
        %v593 = vpop.trf.xlu0
        %v594 = vpop.trf.xlu0
        %v595 = vpop.trf.xlu0
        %v596 = vpop.trf.xlu0
        %v597 = vpop.trf.xlu0
        %v598 = vpop.trf.xlu0
        %v599 = vpop.trf.xlu0
        %v600 = vpop.trf.xlu0
        %v601 = vpop.trf.xlu0
        %v602 = vpop.trf.xlu0
        %v604 = vsel %vm523, %v587, 0
        %606 = vmatpush.msra.mxu0 0.0
        %607 = vmatpush.msra.mxu0 0.0
        %608 = vmatpush.msra.mxu0 0.0
        %609 = vmatpush.msra.mxu0 0.0
        %610 = vmatpush.msra.mxu0 0.0
        %611 = vmatpush.msra.mxu0 0.0
        %612 = vmatpush.msra.mxu0 0.0
        %613 = vmatpush.msra.mxu0 0.0
        %614 = vmatpush.msra.mxu0 %v568
        %615 = vmatpush.msra.mxu0 %v567
        %616 = vmatpush.msra.mxu0 %v566
        %617 = vmatpush.msra.mxu0 %v565
        %618 = vmatpush.msra.mxu0 %v564
        %619 = vmatpush.msra.mxu0 %v563
        %620 = vmatpush.msra.mxu0 %v562
        %621 = vmatpush.msra.mxu0 %v561
        %622 = vmatmul.f32.gmra.mxu0 %v604
        %v623 = vpop.f32.mrf.mxu0
        %v624 = vadd.f32 0.0, %v623
        %625 = vdwg.mxu0
        %vm626 = vcmask 64512
        %v628 = vsel %vm626, %v569, 0
        %v631 = vsel %vm626, %v570, 0
        %633 = vmatpush.msra.mxu0 0.0
        %634 = vmatpush.msra.mxu0 0.0
        %635 = vmatpush.msra.mxu0 0.0
        %636 = vmatpush.msra.mxu0 0.0
        %637 = vmatpush.msra.mxu0 0.0
        %638 = vmatpush.msra.mxu0 0.0
        %639 = vmatpush.msra.mxu0 0.0
        %640 = vmatpush.msra.mxu0 0.0
        %641 = vmatpush.msra.mxu0 0.0
        %642 = vmatpush.msra.mxu0 0.0
        %643 = vmatpush.msra.mxu0 0.0
        %644 = vmatpush.msra.mxu0 0.0
        %645 = vmatpush.msra.mxu0 0.0
        %646 = vmatpush.msra.mxu0 0.0
        %647 = vmatpush.msra.mxu0 0.0
        %648 = vmatpush.msra.mxu0 %v624
        %649 = vmatmul.f32.gmra.mxu0 %v628
        %v650 = vpop.f32.mrf.mxu0
        %v651 = vadd.f32 0.0, %v650
        %652 = vmatmul.f32.gmra.mxu0 %v631
        %v653 = vpop.f32.mrf.mxu0
        %v654 = vadd.f32 0.0, %v653
        %655 = vdwg.mxu0
        %vm656 = vcmask 130048
        %v658 = vsel %vm656, %v489, 0
        %v661 = vsel %vm656, %v490, 0
        %663 = vmatpush.msra.mxu0 0.0
        %664 = vmatpush.msra.mxu0 0.0
        %665 = vmatpush.msra.mxu0 0.0
        %666 = vmatpush.msra.mxu0 0.0
        %667 = vmatpush.msra.mxu0 0.0
        %668 = vmatpush.msra.mxu0 0.0
        %669 = vmatpush.msra.mxu0 0.0
        %670 = vmatpush.msra.mxu0 0.0
        %671 = vmatpush.msra.mxu0 0.0
        %672 = vmatpush.msra.mxu0 0.0
        %673 = vmatpush.msra.mxu0 0.0
        %674 = vmatpush.msra.mxu0 0.0
        %675 = vmatpush.msra.mxu0 0.0
        %676 = vmatpush.msra.mxu0 0.0
        %677 = vmatpush.msra.mxu0 %v551
        %678 = vmatpush.msra.mxu0 %v548
        %679 = vmatmul.f32.gmra.mxu0 %v658
        %v680 = vpop.f32.mrf.mxu0
        %v681 = vadd.f32 %v651, %v680
        %682 = vmatmul.f32.gmra.mxu0 %v661
        %v683 = vpop.f32.mrf.mxu0
        %v684 = vadd.f32 %v654, %v683
        %685 = vdwg.mxu0
        %v686 = vld [vmem:[%s466] sm:$0xff]
        %v687 = vld [vmem:[%s466 + $0x8] sm:$0xff]
        %v688 = vld [vmem:[%s466 + $0x10] sm:$0xff]
        %v689 = vld [vmem:[%s466 + $0x18] sm:$0xff]
        %v690 = vld [vmem:[%s466 + $0x20] sm:$0xff]
        %v691 = vld [vmem:[%s466 + $0x28] sm:$0xff]
        %v692 = vld [vmem:[%s466 + $0x30] sm:$0xff]
        %v693 = vld [vmem:[%s466 + $0x38] sm:$0xff]
        %v694 = vld [vmem:[#allocation7] sm:$0xff]
        %v695 = vld [vmem:[#allocation7 + $0x8] sm:$0xff]
        %v696 = vld [vmem:[#allocation7 + $0x10] sm:$0xff]
        %v697 = vld [vmem:[#allocation7 + $0x18] sm:$0xff]
        %v698 = vld [vmem:[#allocation7 + $0x20] sm:$0xff]
        %v699 = vld [vmem:[#allocation7 + $0x28] sm:$0xff]
        %v700 = vld [vmem:[#allocation7 + $0x30] sm:$0xff]
        %v701 = vld [vmem:[#allocation7 + $0x38] sm:$0xff]
        %v702 = vld [vmem:[%s8] sm:$0xff]
        %v703 = vld [vmem:[%s8 + $0x8] sm:$0xff]
        %704 = vxpose.xlu0.b32.start [1/16] %v686, 128
        %705 = vxpose.xlu0.b32.cont [2/16] %v687, 128
        %706 = vxpose.xlu0.b32.cont [3/16] %v688, 128
        %707 = vxpose.xlu0.b32.cont [4/16] %v689, 128
        %708 = vxpose.xlu0.b32.cont [5/16] %v690, 128
        %709 = vxpose.xlu0.b32.cont [6/16] %v691, 128
        %710 = vxpose.xlu0.b32.cont [7/16] %v692, 128
        %711 = vxpose.xlu0.b32.cont [8/16] %v693, 128
        %712 = vxpose.xlu0.b32.cont [9/16] 0.0, 128
        %713 = vxpose.xlu0.b32.cont [10/16] 0.0, 128
        %714 = vxpose.xlu0.b32.cont [11/16] 0.0, 128
        %715 = vxpose.xlu0.b32.cont [12/16] 0.0, 128
        %716 = vxpose.xlu0.b32.cont [13/16] 0.0, 128
        %717 = vxpose.xlu0.b32.cont [14/16] 0.0, 128
        %718 = vxpose.xlu0.b32.cont [15/16] 0.0, 128
        %719 = vxpose.xlu0.b32.end [16/16] 0.0, 128
        %v720 = vpop.trf.xlu0
        %v721 = vpop.trf.xlu0
        %v722 = vpop.trf.xlu0
        %v723 = vpop.trf.xlu0
        %v724 = vpop.trf.xlu0
        %v725 = vpop.trf.xlu0
        %v726 = vpop.trf.xlu0
        %v727 = vpop.trf.xlu0
        %v728 = vpop.trf.xlu0
        %v729 = vpop.trf.xlu0
        %v730 = vpop.trf.xlu0
        %v731 = vpop.trf.xlu0
        %v732 = vpop.trf.xlu0
        %v733 = vpop.trf.xlu0
        %v734 = vpop.trf.xlu0
        %v735 = vpop.trf.xlu0
        %v737 = vsel %vm523, %v720, 0
        %739 = vmatpush.msra.mxu0 0.0
        %740 = vmatpush.msra.mxu0 0.0
        %741 = vmatpush.msra.mxu0 0.0
        %742 = vmatpush.msra.mxu0 0.0
        %743 = vmatpush.msra.mxu0 0.0
        %744 = vmatpush.msra.mxu0 0.0
        %745 = vmatpush.msra.mxu0 0.0
        %746 = vmatpush.msra.mxu0 0.0
        %747 = vmatpush.msra.mxu0 %v701
        %748 = vmatpush.msra.mxu0 %v700
        %749 = vmatpush.msra.mxu0 %v699
        %750 = vmatpush.msra.mxu0 %v698
        %751 = vmatpush.msra.mxu0 %v697
        %752 = vmatpush.msra.mxu0 %v696
        %753 = vmatpush.msra.mxu0 %v695
        %754 = vmatpush.msra.mxu0 %v694
        %755 = vmatmul.f32.gmra.mxu0 %v737
        %v756 = vpop.f32.mrf.mxu0
        %v757 = vadd.f32 0.0, %v756
        %758 = vdwg.mxu0
        %vm759 = vcmask 31744
        %v761 = vsel %vm759, %v702, 0
        %v764 = vsel %vm759, %v703, 0
        %vm766 = vcmask 1043456
        %v768 = vsel %vm766, %v757, 0
        %770 = vmatpush.msra.mxu0 0.0
        %771 = vmatpush.msra.mxu0 0.0
        %772 = vmatpush.msra.mxu0 0.0
        %773 = vmatpush.msra.mxu0 0.0
        %774 = vmatpush.msra.mxu0 0.0
        %775 = vmatpush.msra.mxu0 0.0
        %776 = vmatpush.msra.mxu0 0.0
        %777 = vmatpush.msra.mxu0 0.0
        %778 = vmatpush.msra.mxu0 0.0
        %779 = vmatpush.msra.mxu0 0.0
        %780 = vmatpush.msra.mxu0 0.0
        %781 = vmatpush.msra.mxu0 0.0
        %782 = vmatpush.msra.mxu0 0.0
        %783 = vmatpush.msra.mxu0 0.0
        %784 = vmatpush.msra.mxu0 0.0
        %785 = vmatpush.msra.mxu0 %v768
        %786 = vmatmul.f32.gmra.mxu0 %v761
        %v787 = vpop.f32.mrf.mxu0
        %v788 = vadd.f32 0.0, %v787
        %789 = vmatmul.f32.gmra.mxu0 %v764
        %v790 = vpop.f32.mrf.mxu0
        %v791 = vadd.f32 0.0, %v790
        %792 = vdwg.mxu0
        %v793 = vadd.f32 %v681, %v788
        %v794 = vadd.f32 %v684, %v791
        %v796 = vperm.slane %v472, 0
        %v798 = vadd.f32 %v793, %v796
        %v799 = vadd.f32 %v794, %v796
        %800 = vst [vmem:[%s471] sm:$0xff] %v798
        %801 = vst [vmem:[%s471 + $0x8] sm:$0xff] %v799
        %p802 = scmp.lt.s32.totalorder %s26, 1
        %s803 = scalar_select %p802, %s26, 1
        %s804 = smul.addr %s803, 2
        %s805 = smul.addr %s804, 8
        %s806 = scalar_lea.vmem %s10, %s805
        // Predicated region
        $region77: #{fwd.1} parent=59 // pred_check
          %p807 = pneg %p269
        $region78: #{fwd.1} parent=59 // pred_check_branch
          %809 = sbr.rel (%p807) target = $region80
        $region79: #{fwd.1} parent=59 // pred_region
          _
        $region80: #{fwd.1} parent=59 // pred_fallthru
          _
      $region60: #{fwd.1} parent=5 // pred_fallthru
        _
      %p810 = scmp.le.s32.totalorder 2, %s21
      // Predicated region
      $region81: #{fwd.1} parent=5 // pred_check
        %p811 = pneg %p810
      $region82: #{fwd.1} parent=5 // pred_check_branch
        %813 = sbr.rel (%p811) target = $region84
      $region83: #{fwd.1} parent=5 // pred_region
        %s814 = ssub.s32 %s21, 2
        // Predicated region
        $region85: #{fwd.1} parent=83 // pred_check
          %p815 = pneg %p275
        $region86: #{fwd.1} parent=83 // pred_check_branch
          %817 = sbr.rel (%p815) target = $region88
        $region87: #{fwd.1} parent=83 // pred_region
          %p818 = scmp.lt.s32.totalorder %s27, 1
          %s819 = scalar_select %p818, %s27, 1
          %s820 = smul.addr %s819, 2
          %s821 = smul.addr %s820, 8
          %s822 = scalar_lea.vmem %s10, %s821
        $region88: #{fwd.1} parent=83 // pred_fallthru
          _
      $region84: #{fwd.1} parent=5 // pred_fallthru
        _
    $region6: #{fwd.1} parent=1 // loop_footer
      %s25 = sadd.s32 1, %s21
    $region7: #{fwd.1} parent=1 // loop_footer_branch
      %20 = sbr.rel target = $region3
    $region8: #{fwd.1} parent=1 // loop_exit
      _
    %823 = vsyncpa [#allocation3], 1
    %s824 = scalar_lea.sflag [#allocation3], 1
    %825 = vsyncpa %s824, 1
    %826 = vsyncpa [#allocation5], 1
    %s827 = scalar_lea.sflag [#allocation5], 1
    %828 = vsyncpa %s827, 1
    %829 = vsyncpa [#allocation8], 1

</llo_original>
